<compile_context>
chip_gen: v7x
topology: tpu7x:2x2x1
jax: 0.10.0
libtpu: 0.0.40
codegen_flags: <defaults>
</compile_context>

<pallas_src>
import math
import numpy as np
import jax
import jax.numpy as jnp
from jax.experimental import pallas as pl
from jax.experimental.pallas import tpu as pltpu


def _cdiv(a, b):
    return (a + b - 1) // b


def _round_up(a, b):
    return _cdiv(a, b) * b


# -----------------------------------------------------------------------------
# Parameter construction: replicates IntRMSNorm.__init__ / IntLUT.__init__.
# -----------------------------------------------------------------------------
def build_int_rmsnorm_params(C, eps, O_in, lnw):
    O_lnw = 11
    addrwidth, bits = 9, 8
    entries = 1 << addrwidth
    table_min, table_max = 0, 2 ** bits - 1

    lnw_q = np.round(np.asarray(lnw, np.float64) * 2.0 ** O_lnw).astype(np.int32)

    rs = ((2.0 ** -3, 2.0 ** 3), (2.0 ** 3, 2.0 ** 9),
          (2.0 ** 9, 2.0 ** 15), (2.0 ** 15, 2.0 ** 22))
    rs = tuple((r0 * 2.0 ** (2 * O_in), r1 * 2.0 ** (2 * O_in)) for r0, r1 in rs)

    alphas, betas, log2denoms, o_outs, tables = [], [], [], [], []
    for alpha, beta in rs:
        denom = (beta - alpha) / (entries - 1)
        log2denom = int(math.ceil(math.log2(denom)))
        denom = 2.0 ** log2denom
        beta = alpha + denom * (entries - 1)

        idx = np.arange(entries, dtype=np.float32)
        xg = idx * np.float32(denom) + np.float32(alpha)
        tf = (1.0 / np.sqrt(xg / np.float32(C) +
                            np.float32(eps * 2.0 ** (2 * O_in)))).astype(np.float32)
        o_out = bits - int(math.ceil(math.log2(float(tf.max()))))
        tab = np.clip(np.round(tf * np.float32(2.0 ** o_out)),
                      table_min, table_max).astype(np.int32)

        alphas.append(int(alpha))
        betas.append(int(beta))
        log2denoms.append(int(log2denom))
        o_outs.append(int(o_out))
        tables.append(tab)

    offset = max(o_outs)
    offsets_diff = [offset - o for o in o_outs]

    return dict(
        C=C, eps=eps, O_in=O_in, O_lnw=O_lnw,
        Trunc_mul1=12, Trunc_mul2=13,
        entries=entries,
        num_tables=len(alphas),
        alphas=alphas, betas=betas,
        log2denoms=log2denoms, offsets_diff=offsets_diff,
        tables=np.stack(tables, axis=0),   # (num_tables, entries) int32
        lnw_q=lnw_q,                       # (C,) int32
    )


# -----------------------------------------------------------------------------
# Compile-time probe: does the VMEM gather (jnp.take) lower on this Mosaic?
# Runs once per process, OFF the hot path; decides the LUT strategy statically.
# -----------------------------------------------------------------------------
_TAKE_SUPPORTED = None


def _take_lut_supported():
    global _TAKE_SUPPORTED
    if _TAKE_SUPPORTED is not None:
        return _TAKE_SUPPORTED

    def probe(idx_ref, tab_ref, o_ref):
        o_ref[...] = jnp.take(tab_ref[0], idx_ref[...], axis=0,
                              mode="promise_in_bounds")

    try:
        fn = pl.pallas_call(
            probe, out_shape=jax.ShapeDtypeStruct((256, 1), jnp.int32))
        jax.jit(fn).lower(
            jax.ShapeDtypeStruct((256, 1), jnp.int32),
            jax.ShapeDtypeStruct((1, 2048), jnp.int32)).compile()
        _TAKE_SUPPORTED = True
    except Exception:
        _TAKE_SUPPORTED = False
    return _TAKE_SUPPORTED


# -----------------------------------------------------------------------------
# Generation-aware VMEM budgeting (v5e/v6e: 128 MiB physical, v7x: 64 MiB).
# -----------------------------------------------------------------------------
def _vmem_config():
    cap = 64 << 20
    try:
        cap = int(getattr(pltpu.get_tpu_info(), "vmem_capacity_bytes", cap))
    except Exception:
        pass
    if cap >= (96 << 20):            # v5e / v6e
        return 64 << 20, 100 << 20   # (tile budget, vmem_limit_bytes)
    return 28 << 20, 48 << 20        # v7x (64 MiB physical)


def _pick_block_rows(n_rows, c, in_bytes, out_bytes, extra_lanes,
                     vmem_budget, max_rows):
    # sublane granularity matching the packed native tile of the input dtype
    mult = max(8, 32 // max(1, in_bytes))
    # double-buffered in+out tiles + in-kernel int32 temporaries (x*x, and the
    # upcast tile for narrow inputs) + the one-hot intermediate if used.
    per_row = (2 * c * in_bytes + 2 * c * out_bytes + c * 4
               + (c * 4 if in_bytes < 4 else 0) + extra_lanes * 4)
    rows = max(mult, (int(vmem_budget) // per_row) // mult * mult)
    rows = min(rows, max_rows)
    # >= 4 grid steps (2 per v7x TensorCore) so BlockSpec double-buffering
    # has something to overlap on both cores; prefer an even step count.
    if n_rows >= 4 * mult:
        rows = min(rows, max(mult, _round_up(_cdiv(n_rows, 4), mult)))
        steps = _cdiv(n_rows, rows)
        if steps > 1 and steps % 2 == 1:
            cand = max(mult, _round_up(_cdiv(n_rows, steps + 1), mult))
            if _cdiv(n_rows, cand) % 2 == 0:
                rows = cand
    rows = min(rows, _round_up(n_rows, mult))
    return int(rows)


# -----------------------------------------------------------------------------
# Kernel: per-row sum of squares -> segmented LUT rsqrt -> two truncating muls.
# -----------------------------------------------------------------------------
def _make_kernel(params, lut_mode, out_dtype):
    alphas = [int(a) for a in params["alphas"]]
    betas = [int(b) for b in params["betas"]]
    log2denoms = [int(v) for v in params["log2denoms"]]
    offsets_diff = [int(v) for v in params["offsets_diff"]]
    entries = int(params["entries"])
    trunc1 = int(params["Trunc_mul1"])
    trunc2 = int(params["Trunc_mul2"])
    num_tables = len(alphas)
    # (x * (r << d)) >> t == (x * r) >> (t - d) for t >= d (arithmetic shift);
    # keeps the int32 intermediate max(offsets_diff) bits smaller.
    fold = trunc1 >= max(offsets_diff)

    def kernel(x_ref, lnw_ref, tab_ref, o_ref):
        x = x_ref[...].astype(jnp.int32)                    # (tm, C) int32
        x_sum = jnp.sum(x * x, axis=-1, keepdims=True)      # (tm, 1) int32

        # LUT segment per row (last matching segment wins, default 0)
        lut_idx = jnp.zeros_like(x_sum)
        for i in range(num_tables):
            in_seg = (x_sum >= np.int32(alphas[i])) & (x_sum < np.int32(betas[i]))
            lut_idx = jnp.where(in_seg, np.int32(i), lut_idx)

        # per-row LUT address: (x_sum - alpha[lut]) >> log2denom[lut], clamped
        idx = jnp.zeros_like(x_sum)
        for i in range(num_tables):
            idx = jnp.where(lut_idx == i,
                            (x_sum - np.int32(alphas[i])) >> log2denoms[i], idx)
        idx = jnp.clip(idx, 0, entries - 1)
        flat_idx = lut_idx * np.int32(entries) + idx        # in [0, nt*entries)

        if lut_mode == "take":
            # Real VMEM gather: O(tm) work, keeps the VALU slot free.
            x_rsqrt = jnp.take(tab_ref[0], flat_idx, axis=0,
                               mode="promise_in_bounds")    # (tm, 1) int32
        else:
            # One-hot fallback (known-good lowering); row tiles are capped at
            # 256 so the (tm, 2048) intermediate stays ~2 MiB.
            tab = tab_ref[...]                              # (1, nt*entries)
            lane = jax.lax.broadcasted_iota(
                jnp.int32, (x_ref.shape[0], tab.shape[1]), 1)
            x_rsqrt = jnp.sum(jnp.where(flat_idx == lane, tab, 0),
                              axis=-1, keepdims=True)       # (tm, 1) int32

        # Re-read x so the upcast tile of narrow inputs is not held live
        # across the LUT section.
        xv = x_ref[...].astype(jnp.int32)
        if fold:
            rsh = jnp.full_like(x_sum, np.int32(trunc1 - offsets_diff[0]))
            for i in range(1, num_tables):
                rsh = jnp.where(lut_idx == i,
                                np.int32(trunc1 - offsets_diff[i]), rsh)
            y = (xv * x_rsqrt) >> rsh
        else:
            shifted = x_rsqrt
            for i in range(num_tables):
                shifted = jnp.where(lut_idx == i, x_rsqrt << offsets_diff[i], shifted)
            y = (xv * shifted) >> trunc1

        y = (y * lnw_ref[...]) >> trunc2
        o_ref[...] = y.astype(out_dtype)

    return kernel


# -----------------------------------------------------------------------------
# Wrapper (jit-able): no host-side pads/slices, no runtime probing, no blocking.
# -----------------------------------------------------------------------------
def int_rmsnorm_pallas(x, params, block_rows=None, out_dtype=jnp.int32):
    orig_shape = x.shape
    C = orig_shape[-1]
    x2 = x.reshape(-1, C)
    # int8/int16 activations stay narrow in HBM and are upcast in-register.
    if not (jnp.issubdtype(x2.dtype, jnp.signedinteger) and x2.dtype.itemsize <= 4):
        x2 = x2.astype(jnp.int32)
    in_bytes = x2.dtype.itemsize
    N = x2.shape[0]

    lut_mode = "take" if _take_lut_supported() else "onehot"

    lnw2 = jnp.asarray(params["lnw_q"], jnp.int32).reshape(1, C)
    tables_flat = jnp.asarray(params["tables"], jnp.int32).reshape(1, -1)
    tab_w = tables_flat.shape[1]                 # num_tables * entries (= 2048)

    vmem_budget, vmem_limit = _vmem_config()
    out_bytes = jnp.dtype(out_dtype).itemsize
    if block_rows is None:
        block_rows = _pick_block_rows(
            N, C, in_bytes, out_bytes,
            extra_lanes=(tab_w if lut_mode == "onehot" else 0),
            vmem_budget=vmem_budget,
            max_rows=1024 if lut_mode == "take" else 256)

    # TODO(synk): no in-kernel guard against int32 overflow of sum(x^2) for very
    #             large C / magnitudes (PyTorch uses int64); caller ensures range.

    grid = (pl.cdiv(N, block_rows),)   # last partial row block handled by Pallas

    out = pl.pallas_call(
        _make_kernel(params, lut_mode, out_dtype),
        out_shape=jax.ShapeDtypeStruct((N, C), out_dtype),
        grid=grid,
        in_specs=[
            pl.BlockSpec((block_rows, C), lambda i: (i, 0)),   # x rows (C full-extent)
            pl.BlockSpec((1, C), lambda i: (0, 0)),            # lnw (constant index)
            pl.BlockSpec((1, tab_w), lambda i: (0, 0)),        # LUT tables (constant)
        ],
        out_specs=pl.BlockSpec((block_rows, C), lambda i: (i, 0)),
        compiler_params=pltpu.CompilerParams(
            dimension_semantics=("parallel",),
            vmem_limit_bytes=vmem_limit),
    )(x2, lnw2, tables_flat)

    return out.reshape(orig_shape)


# -----------------------------------------------------------------------------
# Pure numpy reference (faithful translation of IntRMSNorm.forward, int64 math).
# -----------------------------------------------------------------------------
def int_rmsnorm_ref(x, params):
    x = np.asarray(x, np.int64)
    alphas = np.asarray(params["alphas"], np.int64)
    betas = np.asarray(params["betas"], np.int64)
    log2denoms = np.asarray(params["log2denoms"], np.int64)
    offsets_diff = np.asarray(params["offsets_diff"], np.int64)
    tables = np.asarray(params["tables"], np.int64)
    lnw = np.asarray(params["lnw_q"], np.int64)
    entries = params["entries"]

    x_sum = np.sum(x * x, axis=-1, keepdims=True)
    x_lut_idx = np.zeros_like(x, dtype=np.int64)
    for i in range(params["num_tables"]):
        mask = (x_sum >= alphas[i]) & (x_sum < betas[i])
        x_lut_idx = np.where(mask, i, x_lut_idx)
    indices = (x_sum - alphas[x_lut_idx]) >> log2denoms[x_lut_idx]
    indices = np.clip(indices, 0, entries - 1)
    x_rsqrt = np.zeros_like(x, dtype=np.int64)
    for i in range(params["num_tables"]):
        x_rsqrt = np.where(x_lut_idx == i, tables[i][indices], x_rsqrt)
    x_rsqrt = x_rsqrt << offsets_diff[x_lut_idx]
    y = (x * x_rsqrt) >> params["Trunc_mul1"]
    y = (y * lnw) >> params["Trunc_mul2"]
    return y


if __name__ == "__main__":
    key = jax.random.PRNGKey(0)
    k_lnw, k_small, k_large, k_lnw2, k_x2 = jax.random.split(key, 5)
    O_in, eps = 4, 1e-6

    # ---- test 1: int32 activations, small RMSNorm shape ----------------------
    B, S, C = 2, 8, 32
    lnw = jax.random.uniform(k_lnw, (C,), jnp.float32, 0.5, 1.5)
    params = build_int_rmsnorm_params(C, eps, O_in, np.asarray(lnw))
    x_small = jax.random.randint(k_small, (B, S // 2, C), -6, 7, dtype=jnp.int32)
    x_large = jax.random.randint(k_large, (B, S - S // 2, C), -120, 121, dtype=jnp.int32)
    x = jnp.concatenate([x_small, x_large], axis=1)          # (B, S, C) int32

    out = jax.block_until_ready(int_rmsnorm_pallas(x, params))
    ref = int_rmsnorm_ref(np.asarray(x), params)
    assert out.shape == x.shape and out.dtype == jnp.int32
    assert np.array_equal(np.asarray(out, dtype=np.int64), ref), "test1 mismatch"

    # ---- test 2: int16 activations, rows not divisible by the tile,
    #      hidden dim not a multiple of 128 (full-extent C, no padding) --------
    B2, S2, C2 = 2, 37, 160
    lnw2 = jax.random.uniform(k_lnw2, (C2,), jnp.float32, 0.5, 1.5)
    params2 = build_int_rmsnorm_params(C2, eps, O_in, np.asarray(lnw2))
    x2 = jax.random.randint(k_x2, (B2, S2, C2), -100, 101,
                            dtype=jnp.int32).astype(jnp.int16)

    out2 = jax.block_until_ready(int_rmsnorm_pallas(x2, params2))
    ref2 = int_rmsnorm_ref(np.asarray(x2), params2)
    assert out2.shape == x2.shape and out2.dtype == jnp.int32
    assert np.array_equal(np.asarray(out2, dtype=np.int64), ref2), "test2 mismatch"

    print("KERNEL_OK")
</pallas_src>

<mosaic_0001>
module attributes {stable_mosaic.version = 11 : i64} {
  func.func @kernel(%arg0: i32, %arg1: memref<16x32xi32, #tpu.memory_space<vmem>>, %arg2: memref<1x32xi32, #tpu.memory_space<vmem>>, %arg3: memref<1x2048xi32, #tpu.memory_space<vmem>>, %arg4: memref<16x32xi32, #tpu.memory_space<vmem>>) attributes {dimension_semantics = [#tpu.dimension_semantics<parallel>], iteration_bounds = array<i64: 1>, scalar_prefetch = 0 : i64, scratch_operands = 0 : i64, tpu.core_type = #tpu.core_type<tc>, window_params = [{transform_indices = @transform_0, window_bounds = array<i64: 16, 32>}, {pipeline_mode = #tpu.pipeline_mode<synchronous>, transform_indices = @transform_1, window_bounds = array<i64: 1, 32>}, {pipeline_mode = #tpu.pipeline_mode<synchronous>, transform_indices = @transform_2, window_bounds = array<i64: 1, 2048>}, {transform_indices = @transform_3, window_bounds = array<i64: 16, 32>}]} {
    %c0 = arith.constant 0 : index
    %c0_0 = arith.constant 0 : index
    %0 = vector.load %arg1[%c0, %c0_0] : memref<16x32xi32, #tpu.memory_space<vmem>>, vector<16x32xi32>
    %1 = arith.muli %0, %0 : vector<16x32xi32>
    %cst = arith.constant dense<0> : vector<16xi32>
    %2 = vector.multi_reduction <add>, %1, %cst [1] : vector<16x32xi32> to vector<16xi32>
    %3 = vector.shape_cast %2 : vector<16xi32> to vector<16x1xi32>
    %c0_i32 = arith.constant 0 : i32
    %4 = vector.broadcast %c0_i32 : i32 to vector<16x1xi32>
    %c32_i32 = arith.constant 32 : i32
    %5 = vector.broadcast %c32_i32 : i32 to vector<16x1xi32>
    %6 = arith.cmpi sge, %3, %5 : vector<16x1xi32>
    %c2076_i32 = arith.constant 2076 : i32
    %7 = vector.broadcast %c2076_i32 : i32 to vector<16x1xi32>
    %8 = arith.cmpi slt, %3, %7 : vector<16x1xi32>
    %9 = arith.andi %6, %8 : vector<16x1xi1>
    %c0_i32_1 = arith.constant 0 : i32
    %10 = vector.broadcast %c0_i32_1 : i32 to vector<16x1xi32>
    %11 = arith.select %9, %10, %4 : vector<16x1xi1>, vector<16x1xi32>
    %c2048_i32 = arith.constant 2048 : i32
    %12 = vector.broadcast %c2048_i32 : i32 to vector<16x1xi32>
    %13 = arith.cmpi sge, %3, %12 : vector<16x1xi32>
    %c132864_i32 = arith.constant 132864 : i32
    %14 = vector.broadcast %c132864_i32 : i32 to vector<16x1xi32>
    %15 = arith.cmpi slt, %3, %14 : vector<16x1xi32>
    %16 = arith.andi %13, %15 : vector<16x1xi1>
    %c1_i32 = arith.constant 1 : i32
    %17 = vector.broadcast %c1_i32 : i32 to vector<16x1xi32>
    %18 = arith.select %16, %17, %11 : vector<16x1xi1>, vector<16x1xi32>
    %c131072_i32 = arith.constant 131072 : i32
    %19 = vector.broadcast %c131072_i32 : i32 to vector<16x1xi32>
    %20 = arith.cmpi sge, %3, %19 : vector<16x1xi32>
    %c8503296_i32 = arith.constant 8503296 : i32
    %21 = vector.broadcast %c8503296_i32 : i32 to vector<16x1xi32>
    %22 = arith.cmpi slt, %3, %21 : vector<16x1xi32>
    %23 = arith.andi %20, %22 : vector<16x1xi1>
    %c2_i32 = arith.constant 2 : i32
    %24 = vector.broadcast %c2_i32 : i32 to vector<16x1xi32>
    %25 = arith.select %23, %24, %18 : vector<16x1xi1>, vector<16x1xi32>
    %c8388608_i32 = arith.constant 8388608 : i32
    %26 = vector.broadcast %c8388608_i32 : i32 to vector<16x1xi32>
    %27 = arith.cmpi sge, %3, %26 : vector<16x1xi32>
    %c1080033280_i32 = arith.constant 1080033280 : i32
    %28 = vector.broadcast %c1080033280_i32 : i32 to vector<16x1xi32>
    %29 = arith.cmpi slt, %3, %28 : vector<16x1xi32>
    %30 = arith.andi %27, %29 : vector<16x1xi1>
    %c3_i32 = arith.constant 3 : i32
    %31 = vector.broadcast %c3_i32 : i32 to vector<16x1xi32>
    %32 = arith.select %30, %31, %25 : vector<16x1xi1>, vector<16x1xi32>
    %c0_i32_2 = arith.constant 0 : i32
    %33 = vector.broadcast %c0_i32_2 : i32 to vector<16x1xi32>
    %c0_i32_3 = arith.constant 0 : i32
    %34 = vector.broadcast %c0_i32_3 : i32 to vector<16x1xi32>
    %35 = arith.cmpi eq, %32, %34 : vector<16x1xi32>
    %c32_i32_4 = arith.constant 32 : i32
    %36 = vector.broadcast %c32_i32_4 : i32 to vector<16x1xi32>
    %37 = arith.subi %3, %36 : vector<16x1xi32>
    %c2_i32_5 = arith.constant 2 : i32
    %38 = vector.broadcast %c2_i32_5 : i32 to vector<16x1xi32>
    %39 = arith.shrsi %37, %38 : vector<16x1xi32>
    %40 = arith.select %35, %39, %33 : vector<16x1xi1>, vector<16x1xi32>
    %c1_i32_6 = arith.constant 1 : i32
    %41 = vector.broadcast %c1_i32_6 : i32 to vector<16x1xi32>
    %42 = arith.cmpi eq, %32, %41 : vector<16x1xi32>
    %c2048_i32_7 = arith.constant 2048 : i32
    %43 = vector.broadcast %c2048_i32_7 : i32 to vector<16x1xi32>
    %44 = arith.subi %3, %43 : vector<16x1xi32>
    %c8_i32 = arith.constant 8 : i32
    %45 = vector.broadcast %c8_i32 : i32 to vector<16x1xi32>
    %46 = arith.shrsi %44, %45 : vector<16x1xi32>
    %47 = arith.select %42, %46, %40 : vector<16x1xi1>, vector<16x1xi32>
    %c2_i32_8 = arith.constant 2 : i32
    %48 = vector.broadcast %c2_i32_8 : i32 to vector<16x1xi32>
    %49 = arith.cmpi eq, %32, %48 : vector<16x1xi32>
    %c131072_i32_9 = arith.constant 131072 : i32
    %50 = vector.broadcast %c131072_i32_9 : i32 to vector<16x1xi32>
    %51 = arith.subi %3, %50 : vector<16x1xi32>
    %c14_i32 = arith.constant 14 : i32
    %52 = vector.broadcast %c14_i32 : i32 to vector<16x1xi32>
    %53 = arith.shrsi %51, %52 : vector<16x1xi32>
    %54 = arith.select %49, %53, %47 : vector<16x1xi1>, vector<16x1xi32>
    %c3_i32_10 = arith.constant 3 : i32
    %55 = vector.broadcast %c3_i32_10 : i32 to vector<16x1xi32>
    %56 = arith.cmpi eq, %32, %55 : vector<16x1xi32>
    %c8388608_i32_11 = arith.constant 8388608 : i32
    %57 = vector.broadcast %c8388608_i32_11 : i32 to vector<16x1xi32>
    %58 = arith.subi %3, %57 : vector<16x1xi32>
    %c21_i32 = arith.constant 21 : i32
    %59 = vector.broadcast %c21_i32 : i32 to vector<16x1xi32>
    %60 = arith.shrsi %58, %59 : vector<16x1xi32>
    %61 = arith.select %56, %60, %54 : vector<16x1xi1>, vector<16x1xi32>
    %c0_i32_12 = arith.constant 0 : i32
    %c511_i32 = arith.constant 511 : i32
    %62 = vector.broadcast %c0_i32_12 : i32 to vector<16x1xi32>
    %63 = arith.maxsi %62, %61 : vector<16x1xi32>
    %64 = vector.broadcast %c511_i32 : i32 to vector<16x1xi32>
    %65 = arith.minsi %64, %63 : vector<16x1xi32>
    %c512_i32 = arith.constant 512 : i32
    %66 = vector.broadcast %c512_i32 : i32 to vector<16x1xi32>
    %67 = arith.muli %32, %66 : vector<16x1xi32>
    %68 = arith.addi %67, %65 : vector<16x1xi32>
    %c0_13 = arith.constant 0 : index
    %c0_14 = arith.constant 0 : index
    %69 = vector.load %arg3[%c0_13, %c0_14] : memref<1x2048xi32, #tpu.memory_space<vmem>>, vector<1x2048xi32>
    %70 = tpu.iota {dimensions = array<i32: 1>} : vector<16x2048xi32>
    %71 = vector.broadcast %68 : vector<16x1xi32> to vector<16x2048xi32>
    %72 = arith.cmpi eq, %71, %70 : vector<16x2048xi32>
    %c0_i32_15 = arith.constant 0 : i32
    %73 = vector.shape_cast %69 : vector<1x2048xi32> to vector<1x2048xi32>
    %74 = vector.broadcast %73 : vector<1x2048xi32> to vector<16x2048xi32>
    %75 = vector.broadcast %c0_i32_15 : i32 to vector<16x2048xi32>
    %76 = arith.select %72, %74, %75 : vector<16x2048xi1>, vector<16x2048xi32>
    %cst_16 = arith.constant dense<0> : vector<16xi32>
    %77 = vector.multi_reduction <add>, %76, %cst_16 [1] : vector<16x2048xi32> to vector<16xi32>
    %78 = vector.shape_cast %77 : vector<16xi32> to vector<16x1xi32>
    %c0_17 = arith.constant 0 : index
    %c0_18 = arith.constant 0 : index
    %79 = vector.load %arg1[%c0_17, %c0_18] : memref<16x32xi32, #tpu.memory_space<vmem>>, vector<16x32xi32>
    %c3_i32_19 = arith.constant 3 : i32
    %80 = vector.broadcast %c3_i32_19 : i32 to vector<16x1xi32>
    %c1_i32_20 = arith.constant 1 : i32
    %81 = vector.broadcast %c1_i32_20 : i32 to vector<16x1xi32>
    %82 = arith.cmpi eq, %32, %81 : vector<16x1xi32>
    %c6_i32 = arith.constant 6 : i32
    %83 = vector.broadcast %c6_i32 : i32 to vector<16x1xi32>
    %84 = arith.select %82, %83, %80 : vector<16x1xi1>, vector<16x1xi32>
    %c2_i32_21 = arith.constant 2 : i32
    %85 = vector.broadcast %c2_i32_21 : i32 to vector<16x1xi32>
    %86 = arith.cmpi eq, %32, %85 : vector<16x1xi32>
    %c9_i32 = arith.constant 9 : i32
    %87 = vector.broadcast %c9_i32 : i32 to vector<16x1xi32>
    %88 = arith.select %86, %87, %84 : vector<16x1xi1>, vector<16x1xi32>
    %c3_i32_22 = arith.constant 3 : i32
    %89 = vector.broadcast %c3_i32_22 : i32 to vector<16x1xi32>
    %90 = arith.cmpi eq, %32, %89 : vector<16x1xi32>
    %c12_i32 = arith.constant 12 : i32
    %91 = vector.broadcast %c12_i32 : i32 to vector<16x1xi32>
    %92 = arith.select %90, %91, %88 : vector<16x1xi1>, vector<16x1xi32>
    %93 = vector.broadcast %78 : vector<16x1xi32> to vector<16x32xi32>
    %94 = arith.muli %79, %93 : vector<16x32xi32>
    %95 = vector.broadcast %92 : vector<16x1xi32> to vector<16x32xi32>
    %96 = arith.shrsi %94, %95 : vector<16x32xi32>
    %c0_23 = arith.constant 0 : index
    %c0_24 = arith.constant 0 : index
    %97 = vector.load %arg2[%c0_23, %c0_24] : memref<1x32xi32, #tpu.memory_space<vmem>>, vector<1x32xi32>
    %98 = vector.broadcast %97 : vector<1x32xi32> to vector<16x32xi32>
    %99 = arith.muli %96, %98 : vector<16x32xi32>
    %c13_i32 = arith.constant 13 : i32
    %100 = vector.broadcast %c13_i32 : i32 to vector<16x32xi32>
    %101 = arith.shrsi %99, %100 : vector<16x32xi32>
    %c0_25 = arith.constant 0 : index
    %c0_26 = arith.constant 0 : index
    %102 = vector.load %arg4[%c0_25, %c0_26] : memref<16x32xi32, #tpu.memory_space<vmem>>, vector<16x32xi32>
    tpu.vector_store %arg4[%c0_25, %c0_26], %101 {strides = array<i32>} : memref<16x32xi32, #tpu.memory_space<vmem>>, vector<16x32xi32>,
    return
  }
  func.func @transform_0(%arg0: i32) -> (i32, i32) {
    %c0_i32 = arith.constant 0 : i32
    %c0_i32_0 = arith.constant 0 : i32
    return %arg0, %c0_i32 : i32, i32
  }
  func.func @transform_1(%arg0: i32) -> (i32, i32) {
    %c0_i32 = arith.constant 0 : i32
    %c0_i32_0 = arith.constant 0 : i32
    %c0_i32_1 = arith.constant 0 : i32
    return %c0_i32, %c0_i32_0 : i32, i32
  }
  func.func @transform_2(%arg0: i32) -> (i32, i32) {
    %c0_i32 = arith.constant 0 : i32
    %c0_i32_0 = arith.constant 0 : i32
    %c0_i32_1 = arith.constant 0 : i32
    return %c0_i32, %c0_i32_0 : i32, i32
  }
  func.func @transform_3(%arg0: i32) -> (i32, i32) {
    %c0_i32 = arith.constant 0 : i32
    %c0_i32_0 = arith.constant 0 : i32
    return %arg0, %c0_i32 : i32, i32
  }
}

</mosaic_0001>

<llo_original>
// kernel: tpu_custom_call.1
$region0: #{tpu_custom_call.1}
  #allocation0 [shape = 'u32[]', space=smem, size = 0x4, offset = 0x4, fixed_abs, tag = 'smem constant byte address 0x4 - core index']
  #allocation1 [shape = 'u32[144,128]{1,0:T(1,128)}', space=vmem, size = 0x12000, scoped, tag = 'internal scratch']
  %s0 = inlined_call_operand.hbm [shape: s32[16,32], index: 0, kind: input, shape index: {}]
  %s1 = inlined_call_operand.vmem [shape: s32[1,32], index: 1, kind: input, shape index: {}]
  %s2 = inlined_call_operand.hbm [shape: s32[1,2048], index: 2, kind: input, shape index: {}]
  %s3 = inlined_call_operand.hbm [shape: s32[16,32], index: 3, kind: output, shape index: {}]
  %s4 = sld [smem:[#allocation0]]
  $region30: #{tpu_custom_call.1} parent=0
    _
  %s6 = ssub.s32 1, %s4
  %s7 = scalar_select 0, %s6, %s4
  $region1: #{tpu_custom_call.1} parent=0
    #allocation2 [shape = 'u8[8192]{0}', space=vmem, size = 0x2000, scoped, tag = 'input window, operand 0, single buffered']
    #allocation3 [shape = 's32[1]{0}', space=sflag, size = 0x4, scoped, tag = 'scoped memory for tpu_custom_call.1']
    #allocation4 [shape = 's32[1]{0}', space=sflag, size = 0x4, scoped, tag = 'scoped memory for tpu_custom_call.1']
    #allocation5 [shape = 'u8[8192]{0}', space=vmem, size = 0x2000, scoped, tag = 'input window, operand 2, single buffered']
    #allocation6 [shape = 's32[1]{0}', space=sflag, size = 0x4, scoped, tag = 'scoped memory for tpu_custom_call.1']
    #allocation7 [shape = 'u8[8192]{0}', space=vmem, size = 0x2000, scoped, tag = 'output window, operand 0, single buffered']
    %8 = vsyncpa [#allocation3], 0
    %9 = vsyncpa [#allocation6], 0
    %10 = vsyncpa [#allocation4], 0
    // Predicated region
    $region2: #{tpu_custom_call.1} parent=1 // pred_check
      _
    $region3: #{tpu_custom_call.1} parent=1 // pred_check_branch
      %12 = sbr.rel (0) target = $region5
    $region4: #{tpu_custom_call.1} parent=1 // pred_region
      %s14 = ssub.s32 256, 256
      %15 = vsyncadd [#allocation3], %s14
      %s16 = sshll.u32 [#allocation2], 4
      %s17 = int_to_ptr.vmem [resolvable:$true] %s16
      %22 = dma.hbm_to_vmem [thread:$0]  %s0, 256, %s17, [#allocation3], 128, 128, 8
    $region5: #{tpu_custom_call.1} parent=1 // pred_fallthru
      _
    // Predicated region
    $region6: #{tpu_custom_call.1} parent=1 // pred_check
      _
    $region7: #{tpu_custom_call.1} parent=1 // pred_check_branch
      %24 = sbr.rel (0) target = $region9
    $region8: #{tpu_custom_call.1} parent=1 // pred_region
      _
    $region9: #{tpu_custom_call.1} parent=1 // pred_fallthru
      _
    // Predicated region
    $region10: #{tpu_custom_call.1} parent=1 // pred_check
      _
    $region11: #{tpu_custom_call.1} parent=1 // pred_check_branch
      %26 = sbr.rel (0) target = $region13
    $region12: #{tpu_custom_call.1} parent=1 // pred_region
      %s28 = ssub.s32 256, 256
      %29 = vsyncadd [#allocation6], %s28
      %s31 = sshll.u32 [#allocation5], 4
      %s32 = int_to_ptr.vmem [resolvable:$true] %s31
      %34 = dma.hbm_to_vmem [thread:$0]  %s2, 256, %s32, [#allocation6]
    $region13: #{tpu_custom_call.1} parent=1 // pred_fallthru
      _
    // Predicated region
    $region14: #{tpu_custom_call.1} parent=1 // pred_check
      _
    $region15: #{tpu_custom_call.1} parent=1 // pred_check_branch
      %36 = sbr.rel (0) target = $region17
    $region16: #{tpu_custom_call.1} parent=1 // pred_region
      %37 = dma.done [#allocation3], 256
    $region17: #{tpu_custom_call.1} parent=1 // pred_fallthru
      _
    // Predicated region
    $region18: #{tpu_custom_call.1} parent=1 // pred_check
      _
    $region19: #{tpu_custom_call.1} parent=1 // pred_check_branch
      %39 = sbr.rel (0) target = $region21
    $region20: #{tpu_custom_call.1} parent=1 // pred_region
      %40 = dma.done [#allocation6], 256
    $region21: #{tpu_custom_call.1} parent=1 // pred_fallthru
      _
    %v41 = vld [vmem:[#allocation2] sm:$0xff]
    %v42 = vld [vmem:[#allocation2 + $0x8] sm:$0xff]
    %v43 = vmul.u32 %v41, %v41
    %v44 = vmul.u32 %v42, %v42
    %vm45 = vcmask 261120
    %v46 = vsel %vm45, %v43, 0
    %v47 = vand.u32 %v46, 65535
    %v48 = vshrl.u32 %v46, 16
    %v49 = vcvt.s32.f32 %v47
    %v50 = vcvt.s32.f32 %v48
    %51 = vadd.xlane.f32.xlu0 %v49
    %v52 = vpop.xlane.xlu0 %51
    %53 = vadd.xlane.f32.xlu0 %v50
    %v54 = vpop.xlane.xlu0 %53
    %v55 = vcvt.f32.s32 %v52
    %v56 = vcvt.f32.s32 %v54
    %v57 = vshll.u32 %v56, 16
    %v58 = vadd.s32 %v57, %v55
    %v59 = vsel %vm45, %v44, 0
    %v60 = vand.u32 %v59, 65535
    %v61 = vshrl.u32 %v59, 16
    %v62 = vcvt.s32.f32 %v60
    %v63 = vcvt.s32.f32 %v61
    %64 = vadd.xlane.f32.xlu0 %v62
    %v65 = vpop.xlane.xlu0 %64
    %66 = vadd.xlane.f32.xlu0 %v63
    %v67 = vpop.xlane.xlu0 %66
    %v68 = vcvt.f32.s32 %v65
    %v69 = vcvt.f32.s32 %v67
    %v70 = vshll.u32 %v69, 16
    %v71 = vadd.s32 %v70, %v68
    %vm72 = vcmp.ge.s32.totalorder %v58, 2048
    %vm73 = vcmp.ge.s32.totalorder %v71, 2048
    %vm74 = vcmp.lt.s32.totalorder %v58, 132864
    %vm75 = vcmp.lt.s32.totalorder %v71, 132864
    %vm76 = vmand %vm72, %vm74
    %vm77 = vmand %vm73, %vm75
    %v78 = vsel %vm76, 1, 0
    %v79 = vsel %vm77, 1, 0
    %vm80 = vcmp.ge.s32.totalorder %v58, 131072
    %vm81 = vcmp.ge.s32.totalorder %v71, 131072
    %vm82 = vcmp.lt.s32.totalorder %v58, 8503296
    %vm83 = vcmp.lt.s32.totalorder %v71, 8503296
    %vm84 = vmand %vm80, %vm82
    %vm85 = vmand %vm81, %vm83
    %v86 = vsel %vm84, 2, %v78
    %v87 = vsel %vm85, 2, %v79
    %vm88 = vcmp.ge.s32.totalorder %v58, 8388608
    %vm89 = vcmp.ge.s32.totalorder %v71, 8388608
    %vm90 = vcmp.lt.s32.totalorder %v58, 1080033280
    %vm91 = vcmp.lt.s32.totalorder %v71, 1080033280
    %vm92 = vmand %vm88, %vm90
    %vm93 = vmand %vm89, %vm91
    %v94 = vsel %vm92, 3, %v86
    %v95 = vsel %vm93, 3, %v87
    %vm96 = vcmp.eq.s32.totalorder %v94, 0
    %vm97 = vcmp.eq.s32.totalorder %v95, 0
    %v98 = vsub.s32 %v58, 32
    %v99 = vsub.s32 %v71, 32
    %v100 = vshra.s32 %v98, 2
    %v101 = vshra.s32 %v99, 2
    %v102 = vsel %vm96, %v100, 0
    %v103 = vsel %vm97, %v101, 0
    %vm104 = vcmp.eq.s32.totalorder %v94, 1
    %vm105 = vcmp.eq.s32.totalorder %v95, 1
    %v106 = vsub.s32 %v58, 2048
    %v107 = vsub.s32 %v71, 2048
    %v108 = vshra.s32 %v106, 8
    %v109 = vshra.s32 %v107, 8
    %v110 = vsel %vm104, %v108, %v102
    %v111 = vsel %vm105, %v109, %v103
    %vm112 = vcmp.eq.s32.totalorder %v94, 2
    %vm113 = vcmp.eq.s32.totalorder %v95, 2
    %v114 = vsub.s32 %v58, 131072
    %v115 = vsub.s32 %v71, 131072
    %v116 = vshra.s32 %v114, 14
    %v117 = vshra.s32 %v115, 14
    %v118 = vsel %vm112, %v116, %v110
    %v119 = vsel %vm113, %v117, %v111
    %vm120 = vcmp.eq.s32.totalorder %v94, 3
    %vm121 = vcmp.eq.s32.totalorder %v95, 3
    %v122 = vsub.s32 %v58, 8388608
    %v123 = vsub.s32 %v71, 8388608
    %v124 = vshra.s32 %v122, 21
    %v125 = vshra.s32 %v123, 21
    %v126 = vsel %vm120, %v124, %v118
    %v127 = vsel %vm121, %v125, %v119
    %vm128 = vcmp.gt.s32.totalorder %v126, 0
    %v129 = vsel %vm128, %v126, 0
    %vm130 = vcmp.gt.s32.totalorder %v127, 0
    %v131 = vsel %vm130, %v127, 0
    %vm132 = vcmp.lt.s32.totalorder %v129, 511
    %v133 = vsel %vm132, %v129, 511
    %vm134 = vcmp.lt.s32.totalorder %v131, 511
    %v135 = vsel %vm134, %v131, 511
    %v136 = vmul.u32 %v94, 512
    %v137 = vmul.u32 %v95, 512
    %v138 = vadd.s32 %v136, %v133
    %v139 = vadd.s32 %v137, %v135
    %v140 = vld [vmem:[#allocation5] sm:$0xff]
    %v141 = vld [vmem:[#allocation5 + $0x8] sm:$0xff]
    %v142 = vlaneseq
    %v143 = vand.u32 %v142, 127
    %v144 = vadd.s32 %v143, 128
    %v145 = vadd.s32 %v143, 256
    %v146 = vadd.s32 %v143, 384
    %v147 = vadd.s32 %v143, 512
    %v148 = vadd.s32 %v143, 640
    %v149 = vadd.s32 %v143, 768
    %v150 = vadd.s32 %v143, 896
    %v151 = vadd.s32 %v143, 1024
    %v152 = vadd.s32 %v143, 1152
    %v153 = vadd.s32 %v143, 1280
    %v154 = vadd.s32 %v143, 1408
    %v155 = vadd.s32 %v143, 1536
    %v156 = vadd.s32 %v143, 1664
    %v157 = vadd.s32 %v143, 1792
    %v158 = vadd.s32 %v143, 1920
    %vm159 = vcmp.eq.s32.totalorder %v138, %v143
    %vm160 = vcmp.eq.s32.totalorder %v138, %v144
    %vm161 = vcmp.eq.s32.totalorder %v138, %v145
    %vm162 = vcmp.eq.s32.totalorder %v138, %v146
    %vm163 = vcmp.eq.s32.totalorder %v138, %v147
    %vm164 = vcmp.eq.s32.totalorder %v138, %v148
    %vm165 = vcmp.eq.s32.totalorder %v138, %v149
    %vm166 = vcmp.eq.s32.totalorder %v138, %v150
    %vm167 = vcmp.eq.s32.totalorder %v138, %v151
    %vm168 = vcmp.eq.s32.totalorder %v138, %v152
    %vm169 = vcmp.eq.s32.totalorder %v138, %v153
    %vm170 = vcmp.eq.s32.totalorder %v138, %v154
    %vm171 = vcmp.eq.s32.totalorder %v138, %v155
    %vm172 = vcmp.eq.s32.totalorder %v138, %v156
    %vm173 = vcmp.eq.s32.totalorder %v138, %v157
    %vm174 = vcmp.eq.s32.totalorder %v138, %v158
    %vm175 = vcmp.eq.s32.totalorder %v139, %v143
    %vm176 = vcmp.eq.s32.totalorder %v139, %v144
    %vm177 = vcmp.eq.s32.totalorder %v139, %v145
    %vm178 = vcmp.eq.s32.totalorder %v139, %v146
    %vm179 = vcmp.eq.s32.totalorder %v139, %v147
    %vm180 = vcmp.eq.s32.totalorder %v139, %v148
    %vm181 = vcmp.eq.s32.totalorder %v139, %v149
    %vm182 = vcmp.eq.s32.totalorder %v139, %v150
    %vm183 = vcmp.eq.s32.totalorder %v139, %v151
    %vm184 = vcmp.eq.s32.totalorder %v139, %v152
    %vm185 = vcmp.eq.s32.totalorder %v139, %v153
    %vm186 = vcmp.eq.s32.totalorder %v139, %v154
    %vm187 = vcmp.eq.s32.totalorder %v139, %v155
    %vm188 = vcmp.eq.s32.totalorder %v139, %v156
    %vm189 = vcmp.eq.s32.totalorder %v139, %v157
    %vm190 = vcmp.eq.s32.totalorder %v139, %v158
    %v191 = vlaneseq
    %v192 = vshrl.u32 %v191, 7
    %v193 = vsub.s32 0, %v192
    %v194 = vrot.slane %v140, %v193
    %v195 = vlaneseq
    %v196 = vshrl.u32 %v195, 7
    %v197 = vsub.s32 1, %v196
    %v198 = vrot.slane %v140, %v197
    %v199 = vlaneseq
    %v200 = vshrl.u32 %v199, 7
    %v201 = vsub.s32 2, %v200
    %v202 = vrot.slane %v140, %v201
    %v203 = vlaneseq
    %v204 = vshrl.u32 %v203, 7
    %v205 = vsub.s32 3, %v204
    %v206 = vrot.slane %v140, %v205
    %v207 = vlaneseq
    %v208 = vshrl.u32 %v207, 7
    %v209 = vsub.s32 4, %v208
    %v210 = vrot.slane %v140, %v209
    %v211 = vlaneseq
    %v212 = vshrl.u32 %v211, 7
    %v213 = vsub.s32 5, %v212
    %v214 = vrot.slane %v140, %v213
    %v215 = vlaneseq
    %v216 = vshrl.u32 %v215, 7
    %v217 = vsub.s32 6, %v216
    %v218 = vrot.slane %v140, %v217
    %v219 = vlaneseq
    %v220 = vshrl.u32 %v219, 7
    %v221 = vsub.s32 7, %v220
    %v222 = vrot.slane %v140, %v221
    %v223 = vlaneseq
    %v224 = vshrl.u32 %v223, 7
    %v225 = vsub.s32 0, %v224
    %v226 = vrot.slane %v141, %v225
    %v227 = vlaneseq
    %v228 = vshrl.u32 %v227, 7
    %v229 = vsub.s32 1, %v228
    %v230 = vrot.slane %v141, %v229
    %v231 = vlaneseq
    %v232 = vshrl.u32 %v231, 7
    %v233 = vsub.s32 2, %v232
    %v234 = vrot.slane %v141, %v233
    %v235 = vlaneseq
    %v236 = vshrl.u32 %v235, 7
    %v237 = vsub.s32 3, %v236
    %v238 = vrot.slane %v141, %v237
    %v239 = vlaneseq
    %v240 = vshrl.u32 %v239, 7
    %v241 = vsub.s32 4, %v240
    %v242 = vrot.slane %v141, %v241
    %v243 = vlaneseq
    %v244 = vshrl.u32 %v243, 7
    %v245 = vsub.s32 5, %v244
    %v246 = vrot.slane %v141, %v245
    %v247 = vlaneseq
    %v248 = vshrl.u32 %v247, 7
    %v249 = vsub.s32 6, %v248
    %v250 = vrot.slane %v141, %v249
    %v251 = vlaneseq
    %v252 = vshrl.u32 %v251, 7
    %v253 = vsub.s32 7, %v252
    %v254 = vrot.slane %v141, %v253
    %v255 = vsel %vm159, %v194, 0
    %v256 = vsel %vm160, %v198, 0
    %v257 = vsel %vm161, %v202, 0
    %v258 = vsel %vm162, %v206, 0
    %v259 = vsel %vm163, %v210, 0
    %v260 = vsel %vm164, %v214, 0
    %v261 = vsel %vm165, %v218, 0
    %v262 = vsel %vm166, %v222, 0
    %v263 = vsel %vm167, %v226, 0
    %v264 = vsel %vm168, %v230, 0
    %v265 = vsel %vm169, %v234, 0
    %v266 = vsel %vm170, %v238, 0
    %v267 = vsel %vm171, %v242, 0
    %v268 = vsel %vm172, %v246, 0
    %v269 = vsel %vm173, %v250, 0
    %v270 = vsel %vm174, %v254, 0
    %v271 = vsel %vm175, %v194, 0
    %v272 = vsel %vm176, %v198, 0
    %v273 = vsel %vm177, %v202, 0
    %v274 = vsel %vm178, %v206, 0
    %v275 = vsel %vm179, %v210, 0
    %v276 = vsel %vm180, %v214, 0
    %v277 = vsel %vm181, %v218, 0
    %v278 = vsel %vm182, %v222, 0
    %v279 = vsel %vm183, %v226, 0
    %v280 = vsel %vm184, %v230, 0
    %v281 = vsel %vm185, %v234, 0
    %v282 = vsel %vm186, %v238, 0
    %v283 = vsel %vm187, %v242, 0
    %v284 = vsel %vm188, %v246, 0
    %v285 = vsel %vm189, %v250, 0
    %v286 = vsel %vm190, %v254, 0
    %v287 = vadd.s32 %v255, %v257
    %v288 = vadd.s32 %v256, %v258
    %v289 = vadd.s32 %v287, %v259
    %v290 = vadd.s32 %v288, %v260
    %v291 = vadd.s32 %v289, %v261
    %v292 = vadd.s32 %v290, %v262
    %v293 = vadd.s32 %v291, %v263
    %v294 = vadd.s32 %v292, %v264
    %v295 = vadd.s32 %v293, %v265
    %v296 = vadd.s32 %v294, %v266
    %v297 = vadd.s32 %v295, %v267
    %v298 = vadd.s32 %v296, %v268
    %v299 = vadd.s32 %v297, %v269
    %v300 = vadd.s32 %v298, %v270
    %v301 = vadd.s32 %v299, %v300
    %v302 = vand.u32 %v301, 65535
    %v303 = vshrl.u32 %v301, 16
    %v304 = vcvt.s32.f32 %v302
    %v305 = vcvt.s32.f32 %v303
    %306 = vadd.xlane.f32.xlu0 %v304
    %v307 = vpop.xlane.xlu0 %306
    %308 = vadd.xlane.f32.xlu0 %v305
    %v309 = vpop.xlane.xlu0 %308
    %v310 = vcvt.f32.s32 %v307
    %v311 = vcvt.f32.s32 %v309
    %v312 = vshll.u32 %v311, 16
    %v313 = vadd.s32 %v312, %v310
    %v314 = vadd.s32 %v271, %v273
    %v315 = vadd.s32 %v272, %v274
    %v316 = vadd.s32 %v314, %v275
    %v317 = vadd.s32 %v315, %v276
    %v318 = vadd.s32 %v316, %v277
    %v319 = vadd.s32 %v317, %v278
    %v320 = vadd.s32 %v318, %v279
    %v321 = vadd.s32 %v319, %v280
    %v322 = vadd.s32 %v320, %v281
    %v323 = vadd.s32 %v321, %v282
    %v324 = vadd.s32 %v322, %v283
    %v325 = vadd.s32 %v323, %v284
    %v326 = vadd.s32 %v324, %v285
    %v327 = vadd.s32 %v325, %v286
    %v328 = vadd.s32 %v326, %v327
    %v329 = vand.u32 %v328, 65535
    %v330 = vshrl.u32 %v328, 16
    %v331 = vcvt.s32.f32 %v329
    %v332 = vcvt.s32.f32 %v330
    %333 = vadd.xlane.f32.xlu0 %v331
    %v334 = vpop.xlane.xlu0 %333
    %335 = vadd.xlane.f32.xlu0 %v332
    %v336 = vpop.xlane.xlu0 %335
    %v337 = vcvt.f32.s32 %v334
    %v338 = vcvt.f32.s32 %v336
    %v339 = vshll.u32 %v338, 16
    %v340 = vadd.s32 %v339, %v337
    %v341 = vsel %vm104, 6, 3
    %v342 = vsel %vm105, 6, 3
    %v343 = vsel %vm112, 9, %v341
    %v344 = vsel %vm113, 9, %v342
    %v345 = vsel %vm120, 12, %v343
    %v346 = vsel %vm121, 12, %v344
    %v347 = vmul.u32 %v41, %v313
    %v348 = vmul.u32 %v42, %v340
    %v349 = vshra.s32 %v347, %v345
    %v350 = vshra.s32 %v348, %v346
    %v351 = vld [vmem:[%s1] sm:$0x1]
    %v352 = vlaneseq
    %v353 = vshrl.u32 %v352, 7
    %v354 = vsub.s32 0, %v353
    %v355 = vrot.slane %v351, %v354
    %v356 = vmul.u32 %v349, %v355
    %v357 = vmul.u32 %v350, %v355
    %v358 = vshra.s32 %v356, 13
    %v359 = vshra.s32 %v357, 13
    %360 = vst.msk [vmem:[#allocation7] sm:$0xff] %vm45, %v358
    %361 = vst.msk [vmem:[#allocation7 + $0x8] sm:$0xff] %vm45, %v359
    // Predicated region
    $region22: #{tpu_custom_call.1} parent=1 // pred_check
      _
    $region23: #{tpu_custom_call.1} parent=1 // pred_check_branch
      %363 = sbr.rel (0) target = $region25
    $region24: #{tpu_custom_call.1} parent=1 // pred_region
      %s365 = ssub.s32 256, 256
      %366 = vsyncadd [#allocation4], %s365
      %s367 = sshll.u32 [#allocation7], 4
      %s368 = int_to_ptr.vmem [resolvable:$true] %s367
      %373 = dma.vmem_to_hbm [thread:$0]  %s368, 256, %s3, [#allocation4], 128, 128, 8
    $region25: #{tpu_custom_call.1} parent=1 // pred_fallthru
      _
    // Predicated region
    $region26: #{tpu_custom_call.1} parent=1 // pred_check
      _
    $region27: #{tpu_custom_call.1} parent=1 // pred_check_branch
      %375 = sbr.rel (0) target = $region29
    $region28: #{tpu_custom_call.1} parent=1 // pred_region
      %376 = dma.done [#allocation4], 256
    $region29: #{tpu_custom_call.1} parent=1 // pred_fallthru
      _
    %377 = vsyncpa [#allocation3], 1
    %378 = vsyncpa [#allocation6], 1
    %379 = vsyncpa [#allocation4], 1

</llo_original>
